<compile_context>
chip_gen: v7x
topology: tpu7x:2x2x1
jax: 0.10.0
libtpu: 0.0.40
codegen_flags: <defaults>
</compile_context>

<pallas_src>
import functools

import jax
import jax.numpy as jnp
from jax.experimental import pallas as pl
from jax.experimental.pallas import tpu as pltpu


def _channel_attention_kernel(x_ref, w1_ref, w2_ref, o_ref, sum_ref, max_ref,
                              *, hw_total, tile_hw):
    # x_ref:   (TILE_B, C, TILE_HW)  streamed spatial tile
    # w1_ref:  (C, Cr)   w2_ref: (Cr, C)   (resident: constant index_map)
    # o_ref:   (TILE_B, C)           written once on the last spatial step
    # sum_ref/max_ref: (TILE_B, C) f32 accumulators, persist across the HW axis
    k = pl.program_id(1)
    num_k = pl.num_programs(1)

    @pl.when(k == 0)
    def _init():
        sum_ref[...] = jnp.zeros_like(sum_ref)
        max_ref[...] = jnp.full_like(max_ref, -jnp.inf)

    xv = x_ref[...]  # keep input dtype; no upfront f32 copy of the tile

    if hw_total % tile_hw != 0:
        # Ragged tail: mask padded lanes (0 for the sum, -inf for the max).
        col = jax.lax.broadcasted_iota(jnp.int32, (1, 1, tile_hw), 2)
        valid = (col + k * tile_hw) < hw_total
        x_sum = jnp.where(valid, xv, jnp.zeros((), xv.dtype))
        x_max = jnp.where(valid, xv, jnp.full((), -jnp.inf, xv.dtype))
    else:
        x_sum = xv
        x_max = xv

    # Fused cast-into-reduction; accumulate in f32.
    sum_ref[...] += jnp.sum(x_sum, axis=-1, dtype=jnp.float32)
    max_ref[...] = jnp.maximum(max_ref[...],
                               jnp.max(x_max, axis=-1).astype(jnp.float32))

    @pl.when(k == num_k - 1)
    def _finalize():
        avg = sum_ref[...] * (1.0 / float(hw_total))   # true mean over H*W
        mx = max_ref[...]
        w1 = w1_ref[...].astype(jnp.float32)
        w2 = w2_ref[...].astype(jnp.float32)
        # f1 (1x1 conv, no bias) + ReLU on both pooled branches.
        a_h = jnp.maximum(jnp.dot(avg, w1, preferred_element_type=jnp.float32), 0.0)
        m_h = jnp.maximum(jnp.dot(mx, w1, preferred_element_type=jnp.float32), 0.0)
        # f2 (1x1 conv, no bias), sum branches, sigmoid.
        logits = (jnp.dot(a_h, w2, preferred_element_type=jnp.float32)
                  + jnp.dot(m_h, w2, preferred_element_type=jnp.float32))
        o_ref[...] = jax.nn.sigmoid(logits).astype(o_ref.dtype)


def channel_attention(x, w1, w2, *, tile_hw=None,
                      target_block_bytes=2 * 1024 * 1024):
    """x: (B, C, H, W) NCHW.  w1: (Cr, C, 1, 1)  w2: (C, Cr, 1, 1) (PyTorch conv layout).

    Returns (B, C, 1, 1), matching the PyTorch module."""
    B, C, H, W = x.shape
    Cr = w1.shape[0]
    assert w1.shape == (Cr, C, 1, 1)
    assert w2.shape == (C, Cr, 1, 1)
    HW = H * W

    # Batch tile: multiple of 8 when possible (sublane-friendly output block and
    # >1 block on the leading "parallel" axis so v7x's 2 TCs split the stream).
    tile_b = 8 if (B % 8 == 0) else B
    num_b = B // tile_b

    # Spatial tile: lane-aligned, sized so a double-buffered block stays small
    # (~2 MiB) on every TPU generation (v7x has half the VMEM of v5e/v6e).
    dtype_bytes = jnp.dtype(x.dtype).itemsize
    if tile_hw is None:
        if HW <= 128:
            tile_hw = HW                       # single full block
        else:
            max_hw = max(128, target_block_bytes // (tile_b * C * dtype_bytes))
            tile_hw = min(HW, max_hw)
            tile_hw = max(128, (tile_hw // 128) * 128)
    assert tile_hw == HW or tile_hw % 128 == 0
    num_hw = pl.cdiv(HW, tile_hw)

    x_flat = x.reshape(B, C, HW)
    # Pre-transpose conv weights so the kernel does row-major matmuls.
    w1_t = w1.reshape(Cr, C).T                 # (C, Cr)
    w2_t = w2.reshape(C, Cr).T                 # (Cr, C)

    kernel = functools.partial(_channel_attention_kernel,
                               hw_total=HW, tile_hw=tile_hw)

    out = pl.pallas_call(
        kernel,
        out_shape=jax.ShapeDtypeStruct((B, C), x.dtype),
        grid_spec=pltpu.PrefetchScalarGridSpec(
            num_scalar_prefetch=0,
            grid=(num_b, num_hw),
            in_specs=[
                pl.BlockSpec((tile_b, C, tile_hw), lambda b, k: (b, 0, k)),
                pl.BlockSpec((C, Cr), lambda b, k: (0, 0)),
                pl.BlockSpec((Cr, C), lambda b, k: (0, 0)),
            ],
            out_specs=pl.BlockSpec((tile_b, C), lambda b, k: (b, 0)),
            scratch_shapes=[
                pltpu.VMEM((tile_b, C), jnp.float32),   # running sum
                pltpu.VMEM((tile_b, C), jnp.float32),   # running max
            ],
        ),
        compiler_params=pltpu.CompilerParams(
            dimension_semantics=("parallel", "arbitrary"),
            vmem_limit_bytes=32 * 1024 * 1024,
        ),
    )(x_flat, w1_t, w2_t)

    return out.reshape(B, C, 1, 1)


def _reference(x, w1, w2):
    """Pure-JAX reference reproducing the PyTorch forward."""
    B, C, H, W = x.shape
    Cr = w1.shape[0]
    avg = jnp.mean(x, axis=(2, 3))      # (B, C)
    mx = jnp.max(x, axis=(2, 3))        # (B, C)
    w1m = w1.reshape(Cr, C)
    w2m = w2.reshape(C, Cr)
    a = jnp.maximum(avg @ w1m.T, 0.0) @ w2m.T
    m = jnp.maximum(mx @ w1m.T, 0.0) @ w2m.T
    return jax.nn.sigmoid(a + m).reshape(B, C, 1, 1)


if __name__ == "__main__":
    key = jax.random.PRNGKey(0)

    def run_case(B, C, ratio, H, W, tile_hw=None):
        Cr = C // ratio
        kx, k1, k2 = jax.random.split(jax.random.fold_in(key, H * W + B), 3)
        x = jax.random.normal(kx, (B, C, H, W), dtype=jnp.float32)
        # Deterministic synthetic weights in PyTorch Conv2d layout (out, in, 1, 1).
        w1 = jax.random.normal(k1, (Cr, C, 1, 1), dtype=jnp.float32) * 0.1
        w2 = jax.random.normal(k2, (C, Cr, 1, 1), dtype=jnp.float32) * 0.1

        out = jax.block_until_ready(channel_attention(x, w1, w2, tile_hw=tile_hw))
        ref = _reference(x, w1, w2)
        assert out.shape == (B, C, 1, 1)
        assert jnp.allclose(out, ref, atol=1e-5, rtol=1e-5), \
            f"mismatch vs reference for shape {(B, C, H, W)}"

    # Aligned streaming path: HW=1024 streamed as 4 tiles of 256.
    run_case(B=2, C=32, ratio=4, H=32, W=32, tile_hw=256)
    # Ragged-tail path: HW=324 streamed as 256 + masked remainder of 68.
    run_case(B=2, C=32, ratio=4, H=18, W=18, tile_hw=256)

    print("KERNEL_OK")
</pallas_src>

<mosaic_0001>
module attributes {stable_mosaic.version = 11 : i64} {
  func.func @_channel_attention_kernel(%arg0: i32, %arg1: i32, %arg2: memref<2x32x256xf32, #tpu.memory_space<vmem>>, %arg3: memref<32x8xf32, #tpu.memory_space<vmem>>, %arg4: memref<8x32xf32, #tpu.memory_space<vmem>>, %arg5: memref<2x32xf32, #tpu.memory_space<vmem>>, %arg6: memref<2x32xf32, #tpu.memory_space<vmem>>, %arg7: memref<2x32xf32, #tpu.memory_space<vmem>>) attributes {dimension_semantics = [#tpu.dimension_semantics<parallel>, #tpu.dimension_semantics<arbitrary>], iteration_bounds = array<i64: 1, 4>, scalar_prefetch = 0 : i64, scratch_operands = 2 : i64, tpu.core_type = #tpu.core_type<tc>, window_params = [{transform_indices = @transform_0, window_bounds = array<i64: 2, 32, 256>}, {pipeline_mode = #tpu.pipeline_mode<synchronous>, transform_indices = @transform_1, window_bounds = array<i64: 32, 8>}, {pipeline_mode = #tpu.pipeline_mode<synchronous>, transform_indices = @transform_2, window_bounds = array<i64: 8, 32>}, {transform_indices = @transform_3, window_bounds = array<i64: 2, 32>}]} {
    %c0_i32 = arith.constant 0 : i32
    %0 = arith.cmpi eq, %arg1, %c0_i32 : i32
    %1 = arith.extui %0 : i1 to i32
    %c0_i32_0 = arith.constant 0 : i32
    %2 = arith.cmpi ne, %1, %c0_i32_0 : i32
    scf.if %2 {
      %cst_13 = arith.constant 0.000000e+00 : f32
      %15 = vector.broadcast %cst_13 : f32 to vector<2x32xf32>
      %c0_14 = arith.constant 0 : index
      %c0_15 = arith.constant 0 : index
      %16 = vector.load %arg6[%c0_14, %c0_15] : memref<2x32xf32, #tpu.memory_space<vmem>>, vector<2x32xf32>
      tpu.vector_store %arg6[%c0_14, %c0_15], %15 {strides = array<i32>} : memref<2x32xf32, #tpu.memory_space<vmem>>, vector<2x32xf32>,
      %cst_16 = arith.constant 0xFF800000 : f32
      %17 = vector.broadcast %cst_16 : f32 to vector<2x32xf32>
      %c0_17 = arith.constant 0 : index
      %c0_18 = arith.constant 0 : index
      %18 = vector.load %arg7[%c0_17, %c0_18] : memref<2x32xf32, #tpu.memory_space<vmem>>, vector<2x32xf32>
      tpu.vector_store %arg7[%c0_17, %c0_18], %17 {strides = array<i32>} : memref<2x32xf32, #tpu.memory_space<vmem>>, vector<2x32xf32>,
    } else {
    }
    %c0 = arith.constant 0 : index
    %c0_1 = arith.constant 0 : index
    %c0_2 = arith.constant 0 : index
    %3 = vector.load %arg2[%c0, %c0_1, %c0_2] : memref<2x32x256xf32, #tpu.memory_space<vmem>>, vector<2x32x256xf32>
    %c0_3 = arith.constant 0 : index
    %c0_4 = arith.constant 0 : index
    %4 = vector.load %arg6[%c0_3, %c0_4] : memref<2x32xf32, #tpu.memory_space<vmem>>, vector<2x32xf32>
    %cst = arith.constant dense<0.000000e+00> : vector<2x32xf32>
    %5 = vector.multi_reduction <add>, %3, %cst [2] : vector<2x32x256xf32> to vector<2x32xf32>
    %6 = arith.addf %4, %5 : vector<2x32xf32>
    %c0_5 = arith.constant 0 : index
    %c0_6 = arith.constant 0 : index
    %7 = vector.load %arg6[%c0_5, %c0_6] : memref<2x32xf32, #tpu.memory_space<vmem>>, vector<2x32xf32>
    tpu.vector_store %arg6[%c0_5, %c0_6], %6 {strides = array<i32>} : memref<2x32xf32, #tpu.memory_space<vmem>>, vector<2x32xf32>,
    %c0_7 = arith.constant 0 : index
    %c0_8 = arith.constant 0 : index
    %8 = vector.load %arg7[%c0_7, %c0_8] : memref<2x32xf32, #tpu.memory_space<vmem>>, vector<2x32xf32>
    %cst_9 = arith.constant dense<0xFF800000> : vector<2x32xf32>
    %9 = vector.multi_reduction <maximumf>, %3, %cst_9 [2] : vector<2x32x256xf32> to vector<2x32xf32>
    %10 = arith.maximumf %8, %9 : vector<2x32xf32>
    %c0_10 = arith.constant 0 : index
    %c0_11 = arith.constant 0 : index
    %11 = vector.load %arg7[%c0_10, %c0_11] : memref<2x32xf32, #tpu.memory_space<vmem>>, vector<2x32xf32>
    tpu.vector_store %arg7[%c0_10, %c0_11], %10 {strides = array<i32>} : memref<2x32xf32, #tpu.memory_space<vmem>>, vector<2x32xf32>,
    %c3_i32 = arith.constant 3 : i32
    %12 = arith.cmpi eq, %arg1, %c3_i32 : i32
    %13 = arith.extui %12 : i1 to i32
    %c0_i32_12 = arith.constant 0 : i32
    %14 = arith.cmpi ne, %13, %c0_i32_12 : i32
    scf.if %14 {
      %c0_13 = arith.constant 0 : index
      %c0_14 = arith.constant 0 : index
      %15 = vector.load %arg6[%c0_13, %c0_14] : memref<2x32xf32, #tpu.memory_space<vmem>>, vector<2x32xf32>
      %cst_15 = arith.constant 9.765625E-4 : f32
      %16 = vector.broadcast %cst_15 : f32 to vector<2x32xf32>
      %17 = arith.mulf %15, %16 : vector<2x32xf32>
      %c0_16 = arith.constant 0 : index
      %c0_17 = arith.constant 0 : index
      %18 = vector.load %arg7[%c0_16, %c0_17] : memref<2x32xf32, #tpu.memory_space<vmem>>, vector<2x32xf32>
      %c0_18 = arith.constant 0 : index
      %c0_19 = arith.constant 0 : index
      %19 = vector.load %arg3[%c0_18, %c0_19] : memref<32x8xf32, #tpu.memory_space<vmem>>, vector<32x8xf32>
      %c0_20 = arith.constant 0 : index
      %c0_21 = arith.constant 0 : index
      %20 = vector.load %arg4[%c0_20, %c0_21] : memref<8x32xf32, #tpu.memory_space<vmem>>, vector<8x32xf32>
      %cst_22 = arith.constant dense<0.000000e+00> : vector<2x8xf32>
      %21 = tpu.matmul %17, %19, %cst_22 {dimension_numbers = #tpu.dot_dimension_numbers<[1], [0], [0], [1], [0, 0, 1, 1], [], []>} : vector<2x32xf32>, vector<32x8xf32>, vector<2x8xf32> -> vector<2x8xf32>
      %cst_23 = arith.constant 0.000000e+00 : f32
      %22 = vector.broadcast %cst_23 : f32 to vector<2x8xf32>
      %23 = arith.maximumf %21, %22 : vector<2x8xf32>
      %cst_24 = arith.constant dense<0.000000e+00> : vector<2x8xf32>
      %24 = tpu.matmul %18, %19, %cst_24 {dimension_numbers = #tpu.dot_dimension_numbers<[1], [0], [0], [1], [0, 0, 1, 1], [], []>} : vector<2x32xf32>, vector<32x8xf32>, vector<2x8xf32> -> vector<2x8xf32>
      %cst_25 = arith.constant 0.000000e+00 : f32
      %25 = vector.broadcast %cst_25 : f32 to vector<2x8xf32>
      %26 = arith.maximumf %24, %25 : vector<2x8xf32>
      %cst_26 = arith.constant dense<0.000000e+00> : vector<2x32xf32>
      %27 = tpu.matmul %23, %20, %cst_26 {dimension_numbers = #tpu.dot_dimension_numbers<[1], [0], [0], [1], [0, 0, 1, 1], [], []>} : vector<2x8xf32>, vector<8x32xf32>, vector<2x32xf32> -> vector<2x32xf32>
      %cst_27 = arith.constant dense<0.000000e+00> : vector<2x32xf32>
      %28 = tpu.matmul %26, %20, %cst_27 {dimension_numbers = #tpu.dot_dimension_numbers<[1], [0], [0], [1], [0, 0, 1, 1], [], []>} : vector<2x8xf32>, vector<8x32xf32>, vector<2x32xf32> -> vector<2x32xf32>
      %29 = arith.addf %27, %28 : vector<2x32xf32>
      %30 = arith.negf %29 : vector<2x32xf32>
      %31 = math.exp %30 : vector<2x32xf32>
      %cst_28 = arith.constant 1.000000e+00 : f32
      %32 = vector.broadcast %cst_28 : f32 to vector<2x32xf32>
      %33 = arith.addf %32, %31 : vector<2x32xf32>
      %34 = arith.divf %32, %33 : vector<2x32xf32>
      %c0_29 = arith.constant 0 : index
      %c0_30 = arith.constant 0 : index
      %35 = vector.load %arg5[%c0_29, %c0_30] : memref<2x32xf32, #tpu.memory_space<vmem>>, vector<2x32xf32>
      tpu.vector_store %arg5[%c0_29, %c0_30], %34 {strides = array<i32>} : memref<2x32xf32, #tpu.memory_space<vmem>>, vector<2x32xf32>,
    } else {
    }
    return
  }
  func.func @transform_0(%arg0: i32, %arg1: i32) -> (i32, i32, i32) {
    %c0_i32 = arith.constant 0 : i32
    %c0_i32_0 = arith.constant 0 : i32
    return %arg0, %c0_i32, %arg1 : i32, i32, i32
  }
  func.func @transform_1(%arg0: i32, %arg1: i32) -> (i32, i32) {
    %c0_i32 = arith.constant 0 : i32
    %c0_i32_0 = arith.constant 0 : i32
    %c0_i32_1 = arith.constant 0 : i32
    return %c0_i32, %c0_i32_0 : i32, i32
  }
  func.func @transform_2(%arg0: i32, %arg1: i32) -> (i32, i32) {
    %c0_i32 = arith.constant 0 : i32
    %c0_i32_0 = arith.constant 0 : i32
    %c0_i32_1 = arith.constant 0 : i32
    return %c0_i32, %c0_i32_0 : i32, i32
  }
  func.func @transform_3(%arg0: i32, %arg1: i32) -> (i32, i32) {
    %c0_i32 = arith.constant 0 : i32
    %c0_i32_0 = arith.constant 0 : i32
    return %arg0, %c0_i32 : i32, i32
  }
}

</mosaic_0001>

<llo_original>
// kernel: tpu_custom_call.1
$region0: #{tpu_custom_call.1}
  #allocation0 [shape = 'u32[]', space=smem, size = 0x4, offset = 0x4, fixed_abs, tag = 'smem constant byte address 0x4 - core index']
  #allocation1 [shape = 'u32[144,128]{1,0:T(1,128)}', space=vmem, size = 0x12000, scoped, tag = 'internal scratch']
  #allocation2 [shape = 'f32[2,32]{1,0:T(2,128)}', space=vmem, size = 0x400, scoped, tag = 'scratch operand']
  #allocation3 [shape = 'f32[2,32]{1,0:T(2,128)}', space=vmem, size = 0x400, scoped, tag = 'scratch operand']
  %s0 = inlined_call_operand.hbm [shape: f32[2,32,1024], index: 0, kind: input, shape index: {}]
  %s1 = inlined_call_operand.vmem [shape: f32[32,8], index: 1, kind: input, shape index: {}]
  %s2 = inlined_call_operand.vmem [shape: f32[8,32], index: 2, kind: input, shape index: {}]
  %s3 = inlined_call_operand.hbm [shape: f32[2,32], index: 3, kind: output, shape index: {}]
  %s4 = sld [smem:[#allocation0]]
  $region57: #{tpu_custom_call.1} parent=0
    _
  %s6 = ssub.s32 1, %s4
  %s7 = scalar_select 0, %s6, %s4
  $region1: #{tpu_custom_call.1} parent=0
    #allocation4 [shape = 'u8[131072]{0}', space=vmem, size = 0x20000, scoped, tag = 'input window, operand 0']
    #allocation5 [shape = 's32[2]{0}', space=sflag, size = 0x8, scoped, tag = 'scoped memory for tpu_custom_call.1']
    #allocation6 [shape = 's32[2]{0}', space=sflag, size = 0x8, scoped, tag = 'scoped memory for tpu_custom_call.1']
    #allocation7 [shape = 'u8[1024]{0}', space=vmem, size = 0x400, scoped, tag = 'output window, operand 0, single buffered']
    %8 = vsyncpa [#allocation5], 0
    %s9 = scalar_lea.sflag [#allocation5], 1
    %10 = vsyncpa %s9, 0
    %11 = vsyncpa [#allocation6], 0
    loop: start=0, step=1, limit=6
    $region2: #{tpu_custom_call.1} parent=1 // loop_pre_header
      _
    $region3: #{tpu_custom_call.1} parent=1 // loop_header
      %s13 = sphi 0, %s17
      %p14 = scmp.ge.s32.totalorder %s13, 6
      %s20 = sphi 0, %s32
      %s21 = sphi 0, %s28
      %s22 = sphi 0, %s20
      %s23 = sphi 0, %s21
      %s24 = sphi 0, %s22
      %s25 = sphi 0, %s23
      %s37 = sphi 0, %s39
      %s40 = sphi 0, %s37
      %s41 = sphi 0, %s40
      %s57 = sphi 0, %s41
      %s61 = sphi 0, %s61
      %s63 = sphi 0, %s61
      %s64 = sphi 0, %s63
      %s78 = sphi 0, %s64
      %s82 = sphi 0, %s82
      %s84 = sphi 0, %s82
      %s85 = sphi 0, %s84
      %s99 = sphi 0, %s85
      %s105 = sphi 0, %s107
      %s108 = sphi 0, %s105
      %s109 = sphi 0, %s108
      %s125 = sphi 0, %s109
    $region4: #{tpu_custom_call.1} parent=1 // loop_header_branch
      %16 = sbr.rel (%p14) target = $region8
    $region5: #{tpu_custom_call.1} parent=1 // loop_body
      %s18 = ssub.s32 %s13, 1
      %s19 = ssub.s32 %s13, 2
      %s26 = sadd.s32 1, %s21
      %p27 = scmp.ge.s32.totalorder %s26, 4
      %s28 = scalar_select %p27, 0, %s26
      %s29 = sadd.s32 1, %s20
      %s30 = scalar_select %p27, %s29, %s20
      %p31 = scmp.ge.s32.totalorder %s30, 1
      %s32 = scalar_select %p31, 0, %s30
      %s33 = ssub.s32 %s20, %s32
      %s34 = ssub.s32 %s21, %s28
      %s35 = sor.u32 %s33, %s34
      %p36 = scmp.eq.s32.totalorder %s35, 0
      %s38 = sadd.s32 %s37, 1
      %s39 = scalar_select %p36, %s37, %s38
      %p42 = pneg %p36
      %p43 = scmp.eq.s32.totalorder %s13, 3
      %p44 = por %p42, %p43
      %p45 = scmp.ne.s32.totalorder %s37, %s40
      %p46 = scmp.eq.s32.totalorder %s13, 0
      %p47 = por %p45, %p46
      %p48 = scmp.ne.s32.totalorder %s37, %s40
      %p49 = scmp.eq.s32.totalorder %s18, 3
      %p50 = por %p48, %p49
      %p51 = scmp.ne.s32.totalorder %s40, %s41
      %p52 = scmp.eq.s32.totalorder %s18, 0
      %p53 = por %p51, %p52
      %p54 = scmp.ne.s32.totalorder %s40, %s41
      %p55 = scmp.eq.s32.totalorder %s19, 3
      %p56 = por %p54, %p55
      %p58 = scmp.ne.s32.totalorder %s41, %s57
      %p59 = scmp.eq.s32.totalorder %s19, 0
      %p60 = por %p58, %p59
      %s62 = sadd.s32 %s61, 1
      %p65 = scmp.eq.s32.totalorder %s13, 3
      %p66 = scmp.ne.s32.totalorder %s61, %s63
      %p67 = scmp.eq.s32.totalorder %s13, 0
      %p68 = por %p66, %p67
      %p69 = scmp.ne.s32.totalorder %s61, %s63
      %p70 = scmp.eq.s32.totalorder %s18, 3
      %p71 = por %p69, %p70
      %p72 = scmp.ne.s32.totalorder %s63, %s64
      %p73 = scmp.eq.s32.totalorder %s18, 0
      %p74 = por %p72, %p73
      %p75 = scmp.ne.s32.totalorder %s63, %s64
      %p76 = scmp.eq.s32.totalorder %s19, 3
      %p77 = por %p75, %p76
      %p79 = scmp.ne.s32.totalorder %s64, %s78
      %p80 = scmp.eq.s32.totalorder %s19, 0
      %p81 = por %p79, %p80
      %s83 = sadd.s32 %s82, 1
      %p86 = scmp.eq.s32.totalorder %s13, 3
      %p87 = scmp.ne.s32.totalorder %s82, %s84
      %p88 = scmp.eq.s32.totalorder %s13, 0
      %p89 = por %p87, %p88
      %p90 = scmp.ne.s32.totalorder %s82, %s84
      %p91 = scmp.eq.s32.totalorder %s18, 3
      %p92 = por %p90, %p91
      %p93 = scmp.ne.s32.totalorder %s84, %s85
      %p94 = scmp.eq.s32.totalorder %s18, 0
      %p95 = por %p93, %p94
      %p96 = scmp.ne.s32.totalorder %s84, %s85
      %p97 = scmp.eq.s32.totalorder %s19, 3
      %p98 = por %p96, %p97
      %p100 = scmp.ne.s32.totalorder %s85, %s99
      %p101 = scmp.eq.s32.totalorder %s19, 0
      %p102 = por %p100, %p101
      %s103 = ssub.s32 %s20, %s32
      %p104 = scmp.eq.s32.totalorder %s103, 0
      %s106 = sadd.s32 %s105, 1
      %s107 = scalar_select %p104, %s105, %s106
      %p110 = pneg %p104
      %p111 = scmp.eq.s32.totalorder %s13, 3
      %p112 = por %p110, %p111
      %p113 = scmp.ne.s32.totalorder %s105, %s108
      %p114 = scmp.eq.s32.totalorder %s13, 0
      %p115 = por %p113, %p114
      %p116 = scmp.ne.s32.totalorder %s105, %s108
      %p117 = scmp.eq.s32.totalorder %s18, 3
      %p118 = por %p116, %p117
      %p119 = scmp.ne.s32.totalorder %s108, %s109
      %p120 = scmp.eq.s32.totalorder %s18, 0
      %p121 = por %p119, %p120
      %p122 = scmp.ne.s32.totalorder %s108, %s109
      %p123 = scmp.eq.s32.totalorder %s19, 3
      %p124 = por %p122, %p123
      %p126 = scmp.ne.s32.totalorder %s109, %s125
      %p127 = scmp.eq.s32.totalorder %s19, 0
      %p128 = por %p126, %p127
      %p129 = scmp.le.s32.totalorder 1, %s13
      %p130 = scmp.lt.s32.totalorder %s13, 5
      %p131 = pnand %p129, %p130
      %p132 = pneg %p131
      // Predicated region
      $region9: #{tpu_custom_call.1} parent=5 // pred_check
        _
      $region10: #{tpu_custom_call.1} parent=5 // pred_check_branch
        %134 = sbr.rel (%p131) target = $region12
      $region11: #{tpu_custom_call.1} parent=5 // pred_region
        %s135 = ssub.s32 %s13, 1
        // Predicated region
        $region13: #{tpu_custom_call.1} parent=11 // pred_check
          %p136 = pneg %p74
        $region14: #{tpu_custom_call.1} parent=11 // pred_check_branch
          %138 = sbr.rel (%p136) target = $region16
        $region15: #{tpu_custom_call.1} parent=11 // pred_region
          _
        $region16: #{tpu_custom_call.1} parent=11 // pred_fallthru
          _
        // Predicated region
        $region17: #{tpu_custom_call.1} parent=11 // pred_check
          %p139 = pneg %p95
        $region18: #{tpu_custom_call.1} parent=11 // pred_check_branch
          %141 = sbr.rel (%p139) target = $region20
        $region19: #{tpu_custom_call.1} parent=11 // pred_region
          _
        $region20: #{tpu_custom_call.1} parent=11 // pred_fallthru
          _
      $region12: #{tpu_custom_call.1} parent=5 // pred_fallthru
        _
      %p142 = scmp.lt.s32.totalorder %s13, 4
      // Predicated region
      $region21: #{tpu_custom_call.1} parent=5 // pred_check
        %p143 = pneg %p142
      $region22: #{tpu_custom_call.1} parent=5 // pred_check_branch
        %145 = sbr.rel (%p143) target = $region24
      $region23: #{tpu_custom_call.1} parent=5 // pred_region
        // Predicated region
        $region25: #{tpu_custom_call.1} parent=23 // pred_check
          %p146 = pneg %p47
        $region26: #{tpu_custom_call.1} parent=23 // pred_check_branch
          %148 = sbr.rel (%p146) target = $region28
        $region27: #{tpu_custom_call.1} parent=23 // pred_region
          %s149 = sand.u32 %s37, 1
          %s150 = scalar_lea.sflag [#allocation5], %s149
          %s151 = sand.u32 %s37, 1
          %s152 = smul.addr %s151, 128
          %s153 = scalar_lea.vmem [#allocation4], %s152
          %s154 = smul.u32 2, %s20
          %s155 = smul.u32 2, %s21
          %s157 = ssub.s32 2048, 2048
          %158 = vsyncadd %s150, %s157
          %s159 = smul.addr %s154, 32
          %s160 = sadd.s32 %s155, %s159
          %s161 = smul.addr %s160, 128
          %s162 = scalar_lea.hbm %s0, %s161
          %s163 = sshll.u32 %s153, 4
          %s164 = int_to_ptr.vmem [resolvable:$true] %s163
          %169 = dma.hbm_to_vmem [thread:$0]  %s162, 2048, %s164, %s150, 1024, 256, 16
        $region28: #{tpu_custom_call.1} parent=23 // pred_fallthru
          _
      $region24: #{tpu_custom_call.1} parent=5 // pred_fallthru
        _
      %p170 = scmp.le.s32.totalorder 1, %s13
      %p171 = scmp.lt.s32.totalorder %s13, 5
      %p172 = pnand %p170, %p171
      %p173 = pneg %p172
      // Predicated region
      $region29: #{tpu_custom_call.1} parent=5 // pred_check
        _
      $region30: #{tpu_custom_call.1} parent=5 // pred_check_branch
        %175 = sbr.rel (%p172) target = $region32
      $region31: #{tpu_custom_call.1} parent=5 // pred_region
        %s176 = ssub.s32 %s13, 1
        %s177 = sand.u32 %s40, 1
        %s178 = scalar_lea.sflag [#allocation5], %s177
        %s179 = sand.u32 %s40, 1
        %s180 = smul.addr %s179, 128
        %s181 = scalar_lea.vmem [#allocation4], %s180
        // Predicated region
        $region33: #{tpu_custom_call.1} parent=31 // pred_check
          %p182 = pneg %p53
        $region34: #{tpu_custom_call.1} parent=31 // pred_check_branch
          %184 = sbr.rel (%p182) target = $region36
        $region35: #{tpu_custom_call.1} parent=31 // pred_region
          %185 = dma.done %s178, 2048
        $region36: #{tpu_custom_call.1} parent=31 // pred_fallthru
          _
        %s186 = sand.u32 %s40, 1
        %s187 = scalar_lea.sflag [#allocation5], %s186
        %s188 = sand.u32 %s40, 1
        %s189 = smul.addr %s188, 128
        %s190 = scalar_lea.vmem [#allocation4], %s189
        %p191 = pneg %p53
        %p192 = pneg %p50
        %p193 = pneg %p74
        %p194 = pneg %p71
        %p195 = pneg %p95
        %p196 = pneg %p92
        %p197 = pneg %p121
        %p198 = pneg %p118
        %s199 = smul.u32 2, %s22
        %s200 = smul.u32 2, %s23
        %p201 = scmp.eq.s32.totalorder %s23, 0
        // Predicated region
        $region37: #{tpu_custom_call.1} parent=31 // pred_check
          %p202 = pneg %p201
        $region38: #{tpu_custom_call.1} parent=31 // pred_check_branch
          %204 = sbr.rel (%p202) target = $region40
        $region39: #{tpu_custom_call.1} parent=31 // pred_region
          %vm205 = vcmask 254976
          %206 = vst.msk [vmem:[#allocation2] sm:$0x3] %vm205, 0.0
          %207 = vst.msk [vmem:[#allocation3] sm:$0x3] %vm205, -inf
        $region40: #{tpu_custom_call.1} parent=31 // pred_fallthru
          _
        %v208 = vld [vmem:[%s181] sm:$0xff]
        %v209 = vld [vmem:[%s181 + $0x8] sm:$0xff]
        %v210 = vld [vmem:[%s181 + $0x10] sm:$0xff]
        %v211 = vld [vmem:[%s181 + $0x18] sm:$0xff]
        %v212 = vld [vmem:[%s181 + $0x20] sm:$0xff]
        %v213 = vld [vmem:[%s181 + $0x28] sm:$0xff]
        %v214 = vld [vmem:[%s181 + $0x30] sm:$0xff]
        %v215 = vld [vmem:[%s181 + $0x38] sm:$0xff]
        %v216 = vld [vmem:[%s181 + $0x40] sm:$0xff]
        %v217 = vld [vmem:[%s181 + $0x48] sm:$0xff]
        %v218 = vld [vmem:[%s181 + $0x50] sm:$0xff]
        %v219 = vld [vmem:[%s181 + $0x58] sm:$0xff]
        %v220 = vld [vmem:[%s181 + $0x60] sm:$0xff]
        %v221 = vld [vmem:[%s181 + $0x68] sm:$0xff]
        %v222 = vld [vmem:[%s181 + $0x70] sm:$0xff]
        %v223 = vld [vmem:[%s181 + $0x78] sm:$0xff]
        %v224 = vld [vmem:[#allocation2] sm:$0x3]
        %v225 = vadd.f32 %v208, %v209
        %226 = vadd.xlane.f32.xlu0 %v225
        %v227 = vpop.xlane.xlu0 %226
        %v228 = vadd.f32 %v210, %v211
        %229 = vadd.xlane.f32.xlu0 %v228
        %v230 = vpop.xlane.xlu0 %229
        %v231 = vadd.f32 %v212, %v213
        %232 = vadd.xlane.f32.xlu0 %v231
        %v233 = vpop.xlane.xlu0 %232
        %v234 = vadd.f32 %v214, %v215
        %235 = vadd.xlane.f32.xlu0 %v234
        %v236 = vpop.xlane.xlu0 %235
        %v237 = vadd.f32 %v216, %v217
        %238 = vadd.xlane.f32.xlu0 %v237
        %v239 = vpop.xlane.xlu0 %238
        %v240 = vadd.f32 %v218, %v219
        %241 = vadd.xlane.f32.xlu0 %v240
        %v242 = vpop.xlane.xlu0 %241
        %v243 = vadd.f32 %v220, %v221
        %244 = vadd.xlane.f32.xlu0 %v243
        %v245 = vpop.xlane.xlu0 %244
        %v246 = vadd.f32 %v222, %v223
        %247 = vadd.xlane.f32.xlu0 %v246
        %v248 = vpop.xlane.xlu0 %247
        %v257 = vlaneseq
        %v258 = vand.u32 %v257, 127
        %v259 = vlaneseq
        %v260 = vshrl.u32 %v259, 7
        %v261 = vsub.s32 %v258, %v260
        %v262 = vrot.slane %v227, %v261
        %v263 = vadd.s32 %v258, 4294967288
        %v264 = vlaneseq
        %v265 = vshrl.u32 %v264, 7
        %v266 = vsub.s32 %v263, %v265
        %v267 = vrot.slane %v230, %v266
        %vm268 = vcmask 130112
        %v269 = vsel %vm268, %v267, %v262
        %v270 = vadd.s32 %v258, 4294967280
        %v271 = vlaneseq
        %v272 = vshrl.u32 %v271, 7
        %v273 = vsub.s32 %v270, %v272
        %v274 = vrot.slane %v233, %v273
        %vm275 = vcmask 195712
        %v276 = vsel %vm275, %v274, %v269
        %v277 = vadd.s32 %v258, 4294967272
        %v278 = vlaneseq
        %v279 = vshrl.u32 %v278, 7
        %v280 = vsub.s32 %v277, %v279
        %v281 = vrot.slane %v236, %v280
        %vm282 = vcmask 261312
        %v283 = vsel %vm282, %v281, %v276
        %v284 = vlaneseq
        %v285 = vshrl.u32 %v284, 7
        %v286 = vsub.s32 %v258, %v285
        %v287 = vrot.slane %v239, %v286
        %v288 = vlaneseq
        %v289 = vshrl.u32 %v288, 7
        %v290 = vsub.s32 %v263, %v289
        %v291 = vrot.slane %v242, %v290
        %v292 = vsel %vm268, %v291, %v287
        %v293 = vlaneseq
        %v294 = vshrl.u32 %v293, 7
        %v295 = vsub.s32 %v270, %v294
        %v296 = vrot.slane %v245, %v295
        %v297 = vsel %vm275, %v296, %v292
        %v298 = vlaneseq
        %v299 = vshrl.u32 %v298, 7
        %v300 = vsub.s32 %v277, %v299
        %v301 = vrot.slane %v248, %v300
        %v302 = vsel %vm282, %v301, %v297
        %vm303 = vcmask 1041409
        %v304 = vsel %vm303, %v302, %v283
        %v306 = vadd.f32 %v224, %v304
        %vm307 = vcmask 254976
        %308 = vst.msk [vmem:[#allocation2] sm:$0x3] %vm307, %v306
        %v309 = vld [vmem:[#allocation3] sm:$0x3]
        %v310 = vmax.f32 %v208, %v209
        %311 = vmax.xlane.f32.xlu0 %v310
        %v312 = vpop.xlane.xlu0 %311
        %v313 = vmax.f32 %v210, %v211
        %314 = vmax.xlane.f32.xlu0 %v313
        %v315 = vpop.xlane.xlu0 %314
        %v316 = vmax.f32 %v212, %v213
        %317 = vmax.xlane.f32.xlu0 %v316
        %v318 = vpop.xlane.xlu0 %317
        %v319 = vmax.f32 %v214, %v215
        %320 = vmax.xlane.f32.xlu0 %v319
        %v321 = vpop.xlane.xlu0 %320
        %v322 = vmax.f32 %v216, %v217
        %323 = vmax.xlane.f32.xlu0 %v322
        %v324 = vpop.xlane.xlu0 %323
        %v325 = vmax.f32 %v218, %v219
        %326 = vmax.xlane.f32.xlu0 %v325
        %v327 = vpop.xlane.xlu0 %326
        %v328 = vmax.f32 %v220, %v221
        %329 = vmax.xlane.f32.xlu0 %v328
        %v330 = vpop.xlane.xlu0 %329
        %v331 = vmax.f32 %v222, %v223
        %332 = vmax.xlane.f32.xlu0 %v331
        %v333 = vpop.xlane.xlu0 %332
        %v342 = vlaneseq
        %v343 = vshrl.u32 %v342, 7
        %v344 = vsub.s32 %v258, %v343
        %v345 = vrot.slane %v312, %v344
        %v346 = vlaneseq
        %v347 = vshrl.u32 %v346, 7
        %v348 = vsub.s32 %v263, %v347
        %v349 = vrot.slane %v315, %v348
        %v350 = vsel %vm268, %v349, %v345
        %v351 = vlaneseq
        %v352 = vshrl.u32 %v351, 7
        %v353 = vsub.s32 %v270, %v352
        %v354 = vrot.slane %v318, %v353
        %v355 = vsel %vm275, %v354, %v350
        %v356 = vlaneseq
        %v357 = vshrl.u32 %v356, 7
        %v358 = vsub.s32 %v277, %v357
        %v359 = vrot.slane %v321, %v358
        %v360 = vsel %vm282, %v359, %v355
        %v361 = vlaneseq
        %v362 = vshrl.u32 %v361, 7
        %v363 = vsub.s32 %v258, %v362
        %v364 = vrot.slane %v324, %v363
        %v365 = vlaneseq
        %v366 = vshrl.u32 %v365, 7
        %v367 = vsub.s32 %v263, %v366
        %v368 = vrot.slane %v327, %v367
        %v369 = vsel %vm268, %v368, %v364
        %v370 = vlaneseq
        %v371 = vshrl.u32 %v370, 7
        %v372 = vsub.s32 %v270, %v371
        %v373 = vrot.slane %v330, %v372
        %v374 = vsel %vm275, %v373, %v369
        %v375 = vlaneseq
        %v376 = vshrl.u32 %v375, 7
        %v377 = vsub.s32 %v277, %v376
        %v378 = vrot.slane %v333, %v377
        %v379 = vsel %vm282, %v378, %v374
        %v380 = vsel %vm303, %v379, %v360
        %v382 = vmax.f32 %v309, %v380
        %383 = vst.msk [vmem:[#allocation3] sm:$0x3] %vm307, %v382
        %p384 = scmp.eq.s32.totalorder %s23, 3
        // Predicated region
        $region41: #{tpu_custom_call.1} parent=31 // pred_check
          %p385 = pneg %p384
        $region42: #{tpu_custom_call.1} parent=31 // pred_check_branch
          %387 = sbr.rel (%p385) target = $region44
        $region43: #{tpu_custom_call.1} parent=31 // pred_region
          %v388 = vld [vmem:[#allocation2] sm:$0x3]
          %v389 = vmul.f32 %v388, 0.0009765625
          %v390 = vld [vmem:[#allocation3] sm:$0x3]
          %v391 = vld [vmem:[%s1] sm:$0xff]
          %v392 = vld [vmem:[%s1 + $0x8] sm:$0xff]
          %v393 = vld [vmem:[%s1 + $0x10] sm:$0xff]
          %v394 = vld [vmem:[%s1 + $0x18] sm:$0xff]
          %v395 = vld [vmem:[%s2] sm:$0xff]
          %vm396 = vcmask 261120
          %v398 = vsel %vm396, %v389, 0
          %400 = vmatprep.subr.mxu0 0.0
          %401 = vmatpush1.msra.mxu0 %v391
          %402 = vmatprep.subr.mxu0 0.0
          %403 = vmatpush1.msra.mxu0 %v392
          %404 = vmatprep.subr.mxu0 0.0
          %405 = vmatpush1.msra.mxu0 %v393
          %406 = vmatprep.subr.mxu0 0.0
          %407 = vmatpush1.msra.mxu0 %v394
          %408 = vmatprep.subr.mxu0 0.0
          %409 = vmatpush1.msra.mxu0 0.0
          %410 = vmatprep.subr.mxu0 0.0
          %411 = vmatpush1.msra.mxu0 0.0
          %412 = vmatprep.subr.mxu0 0.0
          %413 = vmatpush1.msra.mxu0 0.0
          %414 = vmatprep.subr.mxu0 0.0
          %415 = vmatpush1.msra.mxu0 0.0
          %416 = vmatprep.subr.mxu0 0.0
          %417 = vmatpush1.msra.mxu0 0.0
          %418 = vmatprep.subr.mxu0 0.0
          %419 = vmatpush1.msra.mxu0 0.0
          %420 = vmatprep.subr.mxu0 0.0
          %421 = vmatpush1.msra.mxu0 0.0
          %422 = vmatprep.subr.mxu0 0.0
          %423 = vmatpush1.msra.mxu0 0.0
          %424 = vmatprep.subr.mxu0 0.0
          %425 = vmatpush1.msra.mxu0 0.0
          %426 = vmatprep.subr.mxu0 0.0
          %427 = vmatpush1.msra.mxu0 0.0
          %428 = vmatprep.subr.mxu0 0.0
          %429 = vmatpush1.msra.mxu0 0.0
          %430 = vmatprep.subr.mxu0 0.0
          %431 = vmatpush1.msra.mxu0 0.0
          %432 = vmatprep.subr.mxu0 0.0
          %433 = vmatpush1.msra.mxu0 0.0
          %434 = vmatprep.subr.mxu0 0.0
          %435 = vmatpush1.msra.mxu0 0.0
          %436 = vmatprep.subr.mxu0 0.0
          %437 = vmatpush1.msra.mxu0 0.0
          %438 = vmatprep.subr.mxu0 0.0
          %439 = vmatpush1.msra.mxu0 0.0
          %440 = vmatprep.subr.mxu0 0.0
          %441 = vmatpush1.msra.mxu0 0.0
          %442 = vmatprep.subr.mxu0 0.0
          %443 = vmatpush1.msra.mxu0 0.0
          %444 = vmatprep.subr.mxu0 0.0
          %445 = vmatpush1.msra.mxu0 0.0
          %446 = vmatprep.subr.mxu0 0.0
          %447 = vmatpush1.msra.mxu0 0.0
          %448 = vmatprep.subr.mxu0 0.0
          %449 = vmatpush1.msra.mxu0 0.0
          %450 = vmatprep.subr.mxu0 0.0
          %451 = vmatpush1.msra.mxu0 0.0
          %452 = vmatprep.subr.mxu0 0.0
          %453 = vmatpush1.msra.mxu0 0.0
          %454 = vmatprep.subr.mxu0 0.0
          %455 = vmatpush1.msra.mxu0 0.0
          %456 = vmatprep.subr.mxu0 0.0
          %457 = vmatpush1.msra.mxu0 0.0
          %458 = vmatprep.subr.mxu0 0.0
          %459 = vmatpush1.msra.mxu0 0.0
          %460 = vmatprep.subr.mxu0 0.0
          %461 = vmatpush1.msra.mxu0 0.0
          %462 = vmatprep.subr.mxu0 0.0
          %463 = vmatpush1.msra.mxu0 0.0
          %464 = vmatprep.mubr.f32.mxu0 0.0
          %465 = vmatmul.mubr.f32.gmra.mrb[0].mxu0 %v398
          %v466 = vpop.f32.mrb[0].mxu0
          %v467 = vadd.f32 0.0, %v466
          %v468 = vpop.f32.mrb[0].mxu0
          %469 = vdwg.mxu0
          %v470 = vmax.f32 %v467, 0.0
          %v472 = vsel %vm396, %v390, 0
          %474 = vmatprep.subr.mxu0 0.0
          %475 = vmatpush1.msra.mxu0 %v391
          %476 = vmatprep.subr.mxu0 0.0
          %477 = vmatpush1.msra.mxu0 %v392
          %478 = vmatprep.subr.mxu0 0.0
          %479 = vmatpush1.msra.mxu0 %v393
          %480 = vmatprep.subr.mxu0 0.0
          %481 = vmatpush1.msra.mxu0 %v394
          %482 = vmatprep.subr.mxu0 0.0
          %483 = vmatpush1.msra.mxu0 0.0
          %484 = vmatprep.subr.mxu0 0.0
          %485 = vmatpush1.msra.mxu0 0.0
          %486 = vmatprep.subr.mxu0 0.0
          %487 = vmatpush1.msra.mxu0 0.0
          %488 = vmatprep.subr.mxu0 0.0
          %489 = vmatpush1.msra.mxu0 0.0
          %490 = vmatprep.subr.mxu0 0.0
          %491 = vmatpush1.msra.mxu0 0.0
          %492 = vmatprep.subr.mxu0 0.0
          %493 = vmatpush1.msra.mxu0 0.0
          %494 = vmatprep.subr.mxu0 0.0
          %495 = vmatpush1.msra.mxu0 0.0
          %496 = vmatprep.subr.mxu0 0.0
          %497 = vmatpush1.msra.mxu0 0.0
          %498 = vmatprep.subr.mxu0 0.0
          %499 = vmatpush1.msra.mxu0 0.0
          %500 = vmatprep.subr.mxu0 0.0
          %501 = vmatpush1.msra.mxu0 0.0
          %502 = vmatprep.subr.mxu0 0.0
          %503 = vmatpush1.msra.mxu0 0.0
          %504 = vmatprep.subr.mxu0 0.0
          %505 = vmatpush1.msra.mxu0 0.0
          %506 = vmatprep.subr.mxu0 0.0
          %507 = vmatpush1.msra.mxu0 0.0
          %508 = vmatprep.subr.mxu0 0.0
          %509 = vmatpush1.msra.mxu0 0.0
          %510 = vmatprep.subr.mxu0 0.0
          %511 = vmatpush1.msra.mxu0 0.0
          %512 = vmatprep.subr.mxu0 0.0
          %513 = vmatpush1.msra.mxu0 0.0
          %514 = vmatprep.subr.mxu0 0.0
          %515 = vmatpush1.msra.mxu0 0.0
          %516 = vmatprep.subr.mxu0 0.0
          %517 = vmatpush1.msra.mxu0 0.0
          %518 = vmatprep.subr.mxu0 0.0
          %519 = vmatpush1.msra.mxu0 0.0
          %520 = vmatprep.subr.mxu0 0.0
          %521 = vmatpush1.msra.mxu0 0.0
          %522 = vmatprep.subr.mxu0 0.0
          %523 = vmatpush1.msra.mxu0 0.0
          %524 = vmatprep.subr.mxu0 0.0
          %525 = vmatpush1.msra.mxu0 0.0
          %526 = vmatprep.subr.mxu0 0.0
          %527 = vmatpush1.msra.mxu0 0.0
          %528 = vmatprep.subr.mxu0 0.0
          %529 = vmatpush1.msra.mxu0 0.0
          %530 = vmatprep.subr.mxu0 0.0
          %531 = vmatpush1.msra.mxu0 0.0
          %532 = vmatprep.subr.mxu0 0.0
          %533 = vmatpush1.msra.mxu0 0.0
          %534 = vmatprep.subr.mxu0 0.0
          %535 = vmatpush1.msra.mxu0 0.0
          %536 = vmatprep.subr.mxu0 0.0
          %537 = vmatpush1.msra.mxu0 0.0
          %538 = vmatprep.mubr.f32.mxu0 0.0
          %539 = vmatmul.mubr.f32.gmra.mrb[0].mxu0 %v472
          %v540 = vpop.f32.mrb[0].mxu0
          %v541 = vadd.f32 0.0, %v540
          %v542 = vpop.f32.mrb[0].mxu0
          %543 = vdwg.mxu0
          %v544 = vmax.f32 %v541, 0.0
          %vm545 = vcmask 64512
          %v547 = vsel %vm545, %v544, 0
          %549 = vmatprep.subr.mxu0 0.0
          %550 = vmatpush1.msra.mxu0 %v395
          %551 = vmatprep.subr.mxu0 0.0
          %552 = vmatpush1.msra.mxu0 0.0
          %553 = vmatprep.subr.mxu0 0.0
          %554 = vmatpush1.msra.mxu0 0.0
          %555 = vmatprep.subr.mxu0 0.0
          %556 = vmatpush1.msra.mxu0 0.0
          %557 = vmatprep.subr.mxu0 0.0
          %558 = vmatpush1.msra.mxu0 0.0
          %559 = vmatprep.subr.mxu0 0.0
          %560 = vmatpush1.msra.mxu0 0.0
          %561 = vmatprep.subr.mxu0 0.0
          %562 = vmatpush1.msra.mxu0 0.0
          %563 = vmatprep.subr.mxu0 0.0
          %564 = vmatpush1.msra.mxu0 0.0
          %565 = vmatprep.subr.mxu0 0.0
          %566 = vmatpush1.msra.mxu0 0.0
          %567 = vmatprep.subr.mxu0 0.0
          %568 = vmatpush1.msra.mxu0 0.0
          %569 = vmatprep.subr.mxu0 0.0
          %570 = vmatpush1.msra.mxu0 0.0
          %571 = vmatprep.subr.mxu0 0.0
          %572 = vmatpush1.msra.mxu0 0.0
          %573 = vmatprep.subr.mxu0 0.0
          %574 = vmatpush1.msra.mxu0 0.0
          %575 = vmatprep.subr.mxu0 0.0
          %576 = vmatpush1.msra.mxu0 0.0
          %577 = vmatprep.subr.mxu0 0.0
          %578 = vmatpush1.msra.mxu0 0.0
          %579 = vmatprep.subr.mxu0 0.0
          %580 = vmatpush1.msra.mxu0 0.0
          %581 = vmatprep.subr.mxu0 0.0
          %582 = vmatpush1.msra.mxu0 0.0
          %583 = vmatprep.subr.mxu0 0.0
          %584 = vmatpush1.msra.mxu0 0.0
          %585 = vmatprep.subr.mxu0 0.0
          %586 = vmatpush1.msra.mxu0 0.0
          %587 = vmatprep.subr.mxu0 0.0
          %588 = vmatpush1.msra.mxu0 0.0
          %589 = vmatprep.subr.mxu0 0.0
          %590 = vmatpush1.msra.mxu0 0.0
          %591 = vmatprep.subr.mxu0 0.0
          %592 = vmatpush1.msra.mxu0 0.0
          %593 = vmatprep.subr.mxu0 0.0
          %594 = vmatpush1.msra.mxu0 0.0
          %595 = vmatprep.subr.mxu0 0.0
          %596 = vmatpush1.msra.mxu0 0.0
          %597 = vmatprep.subr.mxu0 0.0
          %598 = vmatpush1.msra.mxu0 0.0
          %599 = vmatprep.subr.mxu0 0.0
          %600 = vmatpush1.msra.mxu0 0.0
          %601 = vmatprep.subr.mxu0 0.0
          %602 = vmatpush1.msra.mxu0 0.0
          %603 = vmatprep.subr.mxu0 0.0
          %604 = vmatpush1.msra.mxu0 0.0
          %605 = vmatprep.subr.mxu0 0.0
          %606 = vmatpush1.msra.mxu0 0.0
          %607 = vmatprep.subr.mxu0 0.0
          %608 = vmatpush1.msra.mxu0 0.0
          %609 = vmatprep.subr.mxu0 0.0
          %610 = vmatpush1.msra.mxu0 0.0
          %611 = vmatprep.subr.mxu0 0.0
          %612 = vmatpush1.msra.mxu0 0.0
          %613 = vmatprep.mubr.f32.mxu0 0.0
          %614 = vmatmul.mubr.f32.gmra.mrb[0].mxu0 %v547
          %v615 = vpop.f32.mrb[0].mxu0
          %v616 = vadd.f32 0.0, %v615
          %v617 = vpop.f32.mrb[0].mxu0
          %618 = vdwg.mxu0
          %v620 = vsel %vm545, %v470, 0
          %622 = vmatprep.subr.mxu0 0.0
          %623 = vmatpush1.msra.mxu0 %v395
          %624 = vmatprep.subr.mxu0 0.0
          %625 = vmatpush1.msra.mxu0 0.0
          %626 = vmatprep.subr.mxu0 0.0
          %627 = vmatpush1.msra.mxu0 0.0
          %628 = vmatprep.subr.mxu0 0.0
          %629 = vmatpush1.msra.mxu0 0.0
          %630 = vmatprep.subr.mxu0 0.0
          %631 = vmatpush1.msra.mxu0 0.0
          %632 = vmatprep.subr.mxu0 0.0
          %633 = vmatpush1.msra.mxu0 0.0
          %634 = vmatprep.subr.mxu0 0.0
          %635 = vmatpush1.msra.mxu0 0.0
          %636 = vmatprep.subr.mxu0 0.0
          %637 = vmatpush1.msra.mxu0 0.0
          %638 = vmatprep.subr.mxu0 0.0
          %639 = vmatpush1.msra.mxu0 0.0
          %640 = vmatprep.subr.mxu0 0.0
          %641 = vmatpush1.msra.mxu0 0.0
          %642 = vmatprep.subr.mxu0 0.0
          %643 = vmatpush1.msra.mxu0 0.0
          %644 = vmatprep.subr.mxu0 0.0
          %645 = vmatpush1.msra.mxu0 0.0
          %646 = vmatprep.subr.mxu0 0.0
          %647 = vmatpush1.msra.mxu0 0.0
          %648 = vmatprep.subr.mxu0 0.0
          %649 = vmatpush1.msra.mxu0 0.0
          %650 = vmatprep.subr.mxu0 0.0
          %651 = vmatpush1.msra.mxu0 0.0
          %652 = vmatprep.subr.mxu0 0.0
          %653 = vmatpush1.msra.mxu0 0.0
          %654 = vmatprep.subr.mxu0 0.0
          %655 = vmatpush1.msra.mxu0 0.0
          %656 = vmatprep.subr.mxu0 0.0
          %657 = vmatpush1.msra.mxu0 0.0
          %658 = vmatprep.subr.mxu0 0.0
          %659 = vmatpush1.msra.mxu0 0.0
          %660 = vmatprep.subr.mxu0 0.0
          %661 = vmatpush1.msra.mxu0 0.0
          %662 = vmatprep.subr.mxu0 0.0
          %663 = vmatpush1.msra.mxu0 0.0
          %664 = vmatprep.subr.mxu0 0.0
          %665 = vmatpush1.msra.mxu0 0.0
          %666 = vmatprep.subr.mxu0 0.0
          %667 = vmatpush1.msra.mxu0 0.0
          %668 = vmatprep.subr.mxu0 0.0
          %669 = vmatpush1.msra.mxu0 0.0
          %670 = vmatprep.subr.mxu0 0.0
          %671 = vmatpush1.msra.mxu0 0.0
          %672 = vmatprep.subr.mxu0 0.0
          %673 = vmatpush1.msra.mxu0 0.0
          %674 = vmatprep.subr.mxu0 0.0
          %675 = vmatpush1.msra.mxu0 0.0
          %676 = vmatprep.subr.mxu0 0.0
          %677 = vmatpush1.msra.mxu0 0.0
          %678 = vmatprep.subr.mxu0 0.0
          %679 = vmatpush1.msra.mxu0 0.0
          %680 = vmatprep.subr.mxu0 0.0
          %681 = vmatpush1.msra.mxu0 0.0
          %682 = vmatprep.subr.mxu0 0.0
          %683 = vmatpush1.msra.mxu0 0.0
          %684 = vmatprep.subr.mxu0 0.0
          %685 = vmatpush1.msra.mxu0 0.0
          %686 = vmatprep.mubr.f32.mxu0 0.0
          %687 = vmatmul.mubr.f32.gmra.mrb[0].mxu0 %v620
          %v688 = vpop.f32.mrb[0].mxu0
          %v689 = vadd.f32 %v616, %v688
          %v690 = vpop.f32.mrb[0].mxu0
          %691 = vdwg.mxu0
          %v692 = vxor.u32 %v689, 2147483648
          %v693 = vmul.f32 %v692, 1.442695
          %v694 = vpow.pop %v693
          %v695 = vadd.f32 %v694, 1.0
          %v696 = vrcp.pop %v695
          %v697 = vmul.f32 1.0, %v696
          %698 = vst.msk [vmem:[#allocation7] sm:$0x3] %vm307, %v697
        $region44: #{tpu_custom_call.1} parent=31 // pred_fallthru
          _
        // Predicated region
        $region45: #{tpu_custom_call.1} parent=31 // pred_check
          %p699 = pneg %p118
        $region46: #{tpu_custom_call.1} parent=31 // pred_check_branch
          %701 = sbr.rel (%p699) target = $region48
        $region47: #{tpu_custom_call.1} parent=31 // pred_region
          %s703 = ssub.s32 32, 32
          %704 = vsyncadd [#allocation6], %s703
          %s705 = smul.addr %s22, 32
          %s706 = scalar_lea.hbm %s3, %s705
          %s708 = sshll.u32 [#allocation7], 4
          %s709 = int_to_ptr.vmem [resolvable:$true] %s708
          %711 = dma.vmem_to_hbm [thread:$0]  %s709, 32, %s706, [#allocation6]
        $region48: #{tpu_custom_call.1} parent=31 // pred_fallthru
          _
        // Predicated region
        $region49: #{tpu_custom_call.1} parent=31 // pred_check
          %p712 = pneg %p118
        $region50: #{tpu_custom_call.1} parent=31 // pred_check_branch
          %714 = sbr.rel (%p712) target = $region52
        $region51: #{tpu_custom_call.1} parent=31 // pred_region
          %715 = dma.done [#allocation6], 32
        $region52: #{tpu_custom_call.1} parent=31 // pred_fallthru
          _
      $region32: #{tpu_custom_call.1} parent=5 // pred_fallthru
        _
      %p716 = scmp.le.s32.totalorder 2, %s13
      // Predicated region
      $region53: #{tpu_custom_call.1} parent=5 // pred_check
        %p717 = pneg %p716
      $region54: #{tpu_custom_call.1} parent=5 // pred_check_branch
        %719 = sbr.rel (%p717) target = $region56
      $region55: #{tpu_custom_call.1} parent=5 // pred_region
        %s720 = ssub.s32 %s13, 2
      $region56: #{tpu_custom_call.1} parent=5 // pred_fallthru
        _
    $region6: #{tpu_custom_call.1} parent=1 // loop_footer
      %s17 = sadd.s32 1, %s13
    $region7: #{tpu_custom_call.1} parent=1 // loop_footer_branch
      %12 = sbr.rel target = $region3
    $region8: #{tpu_custom_call.1} parent=1 // loop_exit
      _
    %721 = vsyncpa [#allocation5], 1
    %s722 = scalar_lea.sflag [#allocation5], 1
    %723 = vsyncpa %s722, 1
    %724 = vsyncpa [#allocation6], 1
    %s725 = scalar_lea.sflag [#allocation6], 1
    %726 = vsyncpa %s725, 1

</llo_original>
